<compile_context>
chip_gen: v7x
topology: tpu7x:2x2x1
jax: 0.10.0
libtpu: 0.0.40
codegen_flags: <defaults>
</compile_context>

<pallas_src>
import jax
import jax.numpy as jnp
from jax.experimental import pallas as pl
from jax.experimental.pallas import tpu as pltpu


def _round_up(x, m):
    return ((x + m - 1) // m) * m


def _vmem_capacity_bytes():
    """Per-core VMEM capacity; conservative fallback = v7x's 64 MiB."""
    try:
        info = pltpu.get_tpu_info()
        cap = getattr(info, "vmem_capacity_bytes", None)
        if cap:
            return int(cap)
    except Exception:
        pass
    return 64 << 20


def _tile_bytes(rows, cols, itemsize, sublane):
    """VMEM footprint of a (rows, cols) tile incl. (sublane, 128) layout padding."""
    return _round_up(max(rows, 1), sublane) * _round_up(max(cols, 1), 128) * itemsize


def mlp_kernel(x_ref, w1_ref, b1_ref, w2_ref, b2_ref, o_ref, acc_ref):
    """One (batch-block, hidden-chunk) grid step.

    Grid = (batch blocks, hidden chunks).  The hidden axis is the fc2
    reduction; partial fc2 products accumulate into an f32 VMEM scratch and the
    bias + sigmoid epilogue runs on the last chunk only.  With a single hidden
    chunk (the common case) the weights stay VMEM-resident across the whole
    batch axis because their block indices never change.
    """
    k = pl.program_id(1)

    @pl.when(k == 0)
    def _():
        acc_ref[...] = jnp.zeros_like(acc_ref)

    # fc1 chunk on the MXU: bf16 operands, f32 accumulation.  x arrives f32
    # from HBM and is cast here (avoids a separate HBM cast pass in the wrapper).
    xb = x_ref[...].astype(jnp.bfloat16)
    h = jnp.dot(xb, w1_ref[...], preferred_element_type=jnp.float32)
    h = h + b1_ref[...]
    # dropout1 -> identity (eval mode); tanh kept in f32 (safe on v5e: no bf16 EUP).
    t = jnp.tanh(h)

    # fc2 partial product: (tb, th) @ (th, out), accumulated in f32.
    acc_ref[...] += jnp.dot(
        t.astype(jnp.bfloat16), w2_ref[...], preferred_element_type=jnp.float32
    )

    @pl.when(k == pl.num_programs(1) - 1)
    def _():
        # dropout2 -> identity (eval mode); sigmoid epilogue.
        f = acc_ref[...] + b2_ref[...]
        o_ref[...] = jax.nn.sigmoid(f).astype(o_ref.dtype)


def _choose_tiling(B, in_sz, hid, out_sz, tile_batch, tile_budget):
    """Return (tb, th, n_k).  n_k == 1 means the weights are VMEM-resident."""

    def fits(tb, th):
        est = (
            2 * _tile_bytes(tb, in_sz, 4, 8)        # x tile (f32, double buffered)
            + 2 * _tile_bytes(in_sz, th, 2, 16)     # w1 chunk (bf16)
            + 2 * _tile_bytes(1, th, 4, 8)          # b1 chunk (f32)
            + 2 * _tile_bytes(th, out_sz, 2, 16)    # w2 chunk (bf16)
            + 2 * _tile_bytes(1, out_sz, 4, 8)      # b2 (f32)
            + 2 * _tile_bytes(tb, out_sz, 4, 8)     # out tile (f32)
            + _tile_bytes(tb, out_sz, 4, 8)         # f32 accumulator scratch
            + 3 * _tile_bytes(tb, th, 4, 8)         # h / tanh / bf16 temporaries
        )
        return est <= tile_budget

    B8 = _round_up(B, 8)
    tb = min(_round_up(tile_batch, 8), B8)
    # v7x has 2 TensorCores: keep >= 2 blocks on the "parallel" batch axis when
    # the batch is large enough to split.
    if B8 >= 16 and tb >= B8:
        tb = _round_up(B8 // 2, 8)

    hid128 = _round_up(hid, 128)
    chunk_candidates = [c for c in (2048, 1024, 512, 256, 128) if c < hid128]

    while True:
        # Preferred: whole bf16 weights resident in VMEM -> fetched once, never
        # re-streamed per batch block.
        if fits(tb, hid128):
            return tb, hid, 1
        # Fallback: chunk the hidden (fc2-reduction) axis.
        for th in chunk_candidates:
            if fits(tb, th):
                hid_p = _round_up(hid, th)
                return tb, th, hid_p // th
        if tb <= 8:
            raise ValueError("MLP shapes too large for VMEM tiling")
        tb = max(8, _round_up(tb // 2, 8))


def prepare_mlp_params(w1, b1, w2, b2):
    """One-time (parameter-load-time) prep, hoisted out of the per-call path.

    Weights are expected pre-transposed to (fan_in, fan_out); they are cast to
    bf16 for the MXU.  Biases stay f32 as (1, n) rows.
    """
    return (
        jnp.asarray(w1, jnp.bfloat16),
        jnp.asarray(b1, jnp.float32).reshape(1, -1),
        jnp.asarray(w2, jnp.bfloat16),
        jnp.asarray(b2, jnp.float32).reshape(1, -1),
    )


def mlp_forward(x, params, *, tile_batch=512):
    """Runs the fused MLP kernel.

    x:      (B, input_size) float32
    params: output of prepare_mlp_params():
            w1 (input_size, hidden_size) bf16, b1 (1, hidden_size) f32,
            w2 (hidden_size, output_size) bf16, b2 (1, output_size) f32
    """
    w1, b1, w2, b2 = params
    B, in_sz = x.shape
    in_w1, hid = w1.shape
    hid_w2, out_sz = w2.shape
    assert in_w1 == in_sz and hid_w2 == hid
    assert b1.shape == (1, hid) and b2.shape == (1, out_sz)
    out_dtype = x.dtype

    # Generation-aware VMEM budget: ~0.8x physical per-core VMEM (headroom for
    # Mosaic internal scratch on v7x; lets v5e/v6e use well beyond 64 MiB).
    vmem_limit = int(_vmem_capacity_bytes() * 0.8)
    tb, th, n_k = _choose_tiling(
        B, in_sz, hid, out_sz, tile_batch, tile_budget=int(vmem_limit * 0.85)
    )

    hid_p = th * n_k
    Bp = _round_up(B, tb)
    n_b = Bp // tb

    # Pad only when strictly needed.  Zero padding is numerically exact here
    # (tanh(0) = 0, padded weight rows/columns are zero).  Feature dims are
    # passed as full block dims, so they never need 128-padding, the output is
    # unpadded, and no output slice copy is required.
    xk = x if Bp == B else jnp.pad(x, ((0, Bp - B), (0, 0)))
    if hid_p != hid:
        w1 = jnp.pad(w1, ((0, 0), (0, hid_p - hid)))
        b1 = jnp.pad(b1, ((0, 0), (0, hid_p - hid)))
        w2 = jnp.pad(w2, ((0, hid_p - hid), (0, 0)))

    grid = (n_b, n_k)

    # Keep the cost estimate consistent with the residency scheme.
    weight_reads = 1 if n_k == 1 else n_b
    cost = pl.CostEstimate(
        flops=2 * Bp * hid_p * (in_sz + out_sz),
        transcendentals=Bp * (hid_p + out_sz),
        bytes_accessed=(
            Bp * in_sz * 4
            + weight_reads * (in_sz * hid_p + hid_p * out_sz) * 2
            + hid_p * 4
            + out_sz * 4
            + Bp * out_sz * 4
        ),
    )

    out = pl.pallas_call(
        mlp_kernel,
        out_shape=jax.ShapeDtypeStruct((Bp, out_sz), out_dtype),
        grid_spec=pltpu.PrefetchScalarGridSpec(
            num_scalar_prefetch=0,
            grid=grid,
            in_specs=[
                pl.BlockSpec((tb, in_sz), lambda i, k: (i, 0)),    # x batch tile
                pl.BlockSpec((in_sz, th), lambda i, k: (0, k)),    # w1 (resident if n_k==1)
                pl.BlockSpec((1, th), lambda i, k: (0, k)),        # b1
                pl.BlockSpec((th, out_sz), lambda i, k: (k, 0)),   # w2 (resident if n_k==1)
                pl.BlockSpec((1, out_sz), lambda i, k: (0, 0)),    # b2 (resident)
            ],
            out_specs=pl.BlockSpec((tb, out_sz), lambda i, k: (i, 0)),
            scratch_shapes=[pltpu.VMEM((tb, out_sz), jnp.float32)],
        ),
        compiler_params=pltpu.CompilerParams(
            dimension_semantics=("parallel", "arbitrary"),
            vmem_limit_bytes=vmem_limit,
        ),
        cost_estimate=cost,
    )(xk, w1, b1, w2, b2)

    return out if Bp == B else out[:B]


def init_linear_params(key, fan_in, fan_out):
    """Deterministic init mirroring torch.nn.Linear default
    (U[-1/sqrt(fan_in), 1/sqrt(fan_in)]).  Weight returned pre-transposed to
    (fan_in, fan_out); bias as (1, fan_out)."""
    kw, kb = jax.random.split(key)
    bound = 1.0 / jnp.sqrt(jnp.float32(fan_in))
    w = jax.random.uniform(kw, (fan_in, fan_out), jnp.float32, -bound, bound)
    b = jax.random.uniform(kb, (1, fan_out), jnp.float32, -bound, bound)
    return w, b


if __name__ == "__main__":
    # Small shapes consistent with MLP(input_size, hidden_size, output_size, dropout).
    batch = 8
    input_size = 32
    hidden_size = 64
    output_size = 16

    key = jax.random.PRNGKey(0)
    kx, k1, k2 = jax.random.split(key, 3)

    x = jax.random.normal(kx, (batch, input_size), jnp.float32)
    w1, b1 = init_linear_params(k1, input_size, hidden_size)
    w2, b2 = init_linear_params(k2, hidden_size, output_size)

    # One-time parameter prep (hoisted out of the per-call path).
    params = prepare_mlp_params(w1, b1, w2, b2)

    out = mlp_forward(x, params)
    out = jax.block_until_ready(out)

    # f32 reference (eval-mode dropout = identity).  Tolerance loosened because
    # the kernel runs its matmuls in bf16 on the MXU (with f32 accumulation).
    ref = jax.nn.sigmoid(jnp.tanh(x @ w1 + b1) @ w2 + b2)
    assert out.shape == (batch, output_size)
    assert jnp.allclose(out, ref, atol=2e-2, rtol=2e-2), float(
        jnp.max(jnp.abs(out - ref))
    )

    print("KERNEL_OK")
</pallas_src>

<mosaic_0001>
module attributes {stable_mosaic.version = 11 : i64} {
  func.func @mlp_kernel(%arg0: i32, %arg1: i32, %arg2: memref<8x32xf32, #tpu.memory_space<vmem>>, %arg3: memref<32x64xbf16, #tpu.memory_space<vmem>>, %arg4: memref<1x64xf32, #tpu.memory_space<vmem>>, %arg5: memref<64x16xbf16, #tpu.memory_space<vmem>>, %arg6: memref<1x16xf32, #tpu.memory_space<vmem>>, %arg7: memref<8x16xf32, #tpu.memory_space<vmem>>, %arg8: memref<8x16xf32, #tpu.memory_space<vmem>>) attributes {dimension_semantics = [#tpu.dimension_semantics<parallel>, #tpu.dimension_semantics<arbitrary>], iteration_bounds = array<i64: 1, 1>, scalar_prefetch = 0 : i64, scratch_operands = 1 : i64, tpu.core_type = #tpu.core_type<tc>, window_params = [{transform_indices = @transform_0, window_bounds = array<i64: 8, 32>}, {transform_indices = @transform_1, window_bounds = array<i64: 32, 64>}, {transform_indices = @transform_2, window_bounds = array<i64: 1, 64>}, {transform_indices = @transform_3, window_bounds = array<i64: 64, 16>}, {pipeline_mode = #tpu.pipeline_mode<synchronous>, transform_indices = @transform_4, window_bounds = array<i64: 1, 16>}, {transform_indices = @transform_5, window_bounds = array<i64: 8, 16>}]} {
    %c0_i32 = arith.constant 0 : i32
    %0 = arith.cmpi eq, %arg1, %c0_i32 : i32
    %1 = arith.extui %0 : i1 to i32
    %c0_i32_0 = arith.constant 0 : i32
    %2 = arith.cmpi ne, %1, %c0_i32_0 : i32
    scf.if %2 {
      %cst_15 = arith.constant 0.000000e+00 : f32
      %20 = vector.broadcast %cst_15 : f32 to vector<8x16xf32>
      %c0_16 = arith.constant 0 : index
      %c0_17 = arith.constant 0 : index
      %21 = vector.load %arg8[%c0_16, %c0_17] : memref<8x16xf32, #tpu.memory_space<vmem>>, vector<8x16xf32>
      tpu.vector_store %arg8[%c0_16, %c0_17], %20 {strides = array<i32>} : memref<8x16xf32, #tpu.memory_space<vmem>>, vector<8x16xf32>,
    } else {
    }
    %c0 = arith.constant 0 : index
    %c0_1 = arith.constant 0 : index
    %3 = vector.load %arg2[%c0, %c0_1] : memref<8x32xf32, #tpu.memory_space<vmem>>, vector<8x32xf32>
    %4 = arith.truncf %3 : vector<8x32xf32> to vector<8x32xbf16>
    %c0_2 = arith.constant 0 : index
    %c0_3 = arith.constant 0 : index
    %5 = vector.load %arg3[%c0_2, %c0_3] : memref<32x64xbf16, #tpu.memory_space<vmem>>, vector<32x64xbf16>
    %cst = arith.constant dense<0.000000e+00> : vector<8x64xf32>
    %6 = tpu.matmul %4, %5, %cst {dimension_numbers = #tpu.dot_dimension_numbers<[1], [0], [0], [1], [0, 0, 1, 1], [], []>} : vector<8x32xbf16>, vector<32x64xbf16>, vector<8x64xf32> -> vector<8x64xf32>
    %c0_4 = arith.constant 0 : index
    %c0_5 = arith.constant 0 : index
    %7 = vector.load %arg4[%c0_4, %c0_5] : memref<1x64xf32, #tpu.memory_space<vmem>>, vector<1x64xf32>
    %8 = vector.broadcast %7 : vector<1x64xf32> to vector<8x64xf32>
    %9 = arith.addf %6, %8 : vector<8x64xf32>
    %10 = math.tanh %9 : vector<8x64xf32>
    %c0_6 = arith.constant 0 : index
    %c0_7 = arith.constant 0 : index
    %11 = vector.load %arg8[%c0_6, %c0_7] : memref<8x16xf32, #tpu.memory_space<vmem>>, vector<8x16xf32>
    %12 = arith.truncf %10 : vector<8x64xf32> to vector<8x64xbf16>
    %c0_8 = arith.constant 0 : index
    %c0_9 = arith.constant 0 : index
    %13 = vector.load %arg5[%c0_8, %c0_9] : memref<64x16xbf16, #tpu.memory_space<vmem>>, vector<64x16xbf16>
    %cst_10 = arith.constant dense<0.000000e+00> : vector<8x16xf32>
    %14 = tpu.matmul %12, %13, %cst_10 {dimension_numbers = #tpu.dot_dimension_numbers<[1], [0], [0], [1], [0, 0, 1, 1], [], []>} : vector<8x64xbf16>, vector<64x16xbf16>, vector<8x16xf32> -> vector<8x16xf32>
    %15 = arith.addf %11, %14 : vector<8x16xf32>
    %c0_11 = arith.constant 0 : index
    %c0_12 = arith.constant 0 : index
    %16 = vector.load %arg8[%c0_11, %c0_12] : memref<8x16xf32, #tpu.memory_space<vmem>>, vector<8x16xf32>
    tpu.vector_store %arg8[%c0_11, %c0_12], %15 {strides = array<i32>} : memref<8x16xf32, #tpu.memory_space<vmem>>, vector<8x16xf32>,
    %c0_i32_13 = arith.constant 0 : i32
    %17 = arith.cmpi eq, %arg1, %c0_i32_13 : i32
    %18 = arith.extui %17 : i1 to i32
    %c0_i32_14 = arith.constant 0 : i32
    %19 = arith.cmpi ne, %18, %c0_i32_14 : i32
    scf.if %19 {
      %c0_15 = arith.constant 0 : index
      %c0_16 = arith.constant 0 : index
      %20 = vector.load %arg8[%c0_15, %c0_16] : memref<8x16xf32, #tpu.memory_space<vmem>>, vector<8x16xf32>
      %c0_17 = arith.constant 0 : index
      %c0_18 = arith.constant 0 : index
      %21 = vector.load %arg6[%c0_17, %c0_18] : memref<1x16xf32, #tpu.memory_space<vmem>>, vector<1x16xf32>
      %22 = vector.broadcast %21 : vector<1x16xf32> to vector<8x16xf32>
      %23 = arith.addf %20, %22 : vector<8x16xf32>
      %24 = arith.negf %23 : vector<8x16xf32>
      %25 = math.exp %24 : vector<8x16xf32>
      %cst_19 = arith.constant 1.000000e+00 : f32
      %26 = vector.broadcast %cst_19 : f32 to vector<8x16xf32>
      %27 = arith.addf %26, %25 : vector<8x16xf32>
      %28 = arith.divf %26, %27 : vector<8x16xf32>
      %c0_20 = arith.constant 0 : index
      %c0_21 = arith.constant 0 : index
      %29 = vector.load %arg7[%c0_20, %c0_21] : memref<8x16xf32, #tpu.memory_space<vmem>>, vector<8x16xf32>
      tpu.vector_store %arg7[%c0_20, %c0_21], %28 {strides = array<i32>} : memref<8x16xf32, #tpu.memory_space<vmem>>, vector<8x16xf32>,
    } else {
    }
    return
  }
  func.func @transform_0(%arg0: i32, %arg1: i32) -> (i32, i32) {
    %c0_i32 = arith.constant 0 : i32
    %c0_i32_0 = arith.constant 0 : i32
    return %arg0, %c0_i32 : i32, i32
  }
  func.func @transform_1(%arg0: i32, %arg1: i32) -> (i32, i32) {
    %c0_i32 = arith.constant 0 : i32
    %c0_i32_0 = arith.constant 0 : i32
    return %c0_i32, %arg1 : i32, i32
  }
  func.func @transform_2(%arg0: i32, %arg1: i32) -> (i32, i32) {
    %c0_i32 = arith.constant 0 : i32
    %c0_i32_0 = arith.constant 0 : i32
    return %c0_i32, %arg1 : i32, i32
  }
  func.func @transform_3(%arg0: i32, %arg1: i32) -> (i32, i32) {
    %c0_i32 = arith.constant 0 : i32
    %c0_i32_0 = arith.constant 0 : i32
    return %arg1, %c0_i32 : i32, i32
  }
  func.func @transform_4(%arg0: i32, %arg1: i32) -> (i32, i32) {
    %c0_i32 = arith.constant 0 : i32
    %c0_i32_0 = arith.constant 0 : i32
    %c0_i32_1 = arith.constant 0 : i32
    return %c0_i32, %c0_i32_0 : i32, i32
  }
  func.func @transform_5(%arg0: i32, %arg1: i32) -> (i32, i32) {
    %c0_i32 = arith.constant 0 : i32
    %c0_i32_0 = arith.constant 0 : i32
    return %arg0, %c0_i32 : i32, i32
  }
}

</mosaic_0001>

<llo_original>
// kernel: tpu_custom_call.1
$region0: #{tpu_custom_call.1}
  #allocation0 [shape = 'u32[]', space=smem, size = 0x4, offset = 0x4, fixed_abs, tag = 'smem constant byte address 0x4 - core index']
  #allocation1 [shape = 'u32[144,128]{1,0:T(1,128)}', space=vmem, size = 0x12000, scoped, tag = 'internal scratch']
  #allocation2 [shape = 'f32[8,16]{1,0:T(8,128)}', space=vmem, size = 0x1000, scoped, tag = 'scratch operand']
  %s0 = inlined_call_operand.vmem [shape: f32[8,32], index: 0, kind: input, shape index: {}]
  %s1 = inlined_call_operand.vmem [shape: bf16[32,64], index: 1, kind: input, shape index: {}]
  %s2 = inlined_call_operand.vmem [shape: f32[1,64], index: 2, kind: input, shape index: {}]
  %s3 = inlined_call_operand.vmem [shape: bf16[64,16], index: 3, kind: input, shape index: {}]
  %s4 = inlined_call_operand.vmem [shape: f32[1,16], index: 4, kind: input, shape index: {}]
  %s5 = inlined_call_operand.hbm [shape: f32[8,16], index: 5, kind: output, shape index: {}]
  %s6 = sld [smem:[#allocation0]]
  $region38: #{tpu_custom_call.1} parent=0
    _
  %s8 = ssub.s32 1, %s6
  %s9 = scalar_select 0, %s8, %s6
  $region1: #{tpu_custom_call.1} parent=0
    #allocation3 [shape = 'u8[4096]{0}', space=vmem, size = 0x1000, scoped, tag = 'output window, operand 0, single buffered']
    #allocation4 [shape = 's32[1]{0}', space=sflag, size = 0x4, scoped, tag = 'scoped memory for tpu_custom_call.1']
    %10 = vsyncpa [#allocation4], 0
    // Predicated region
    $region2: #{tpu_custom_call.1} parent=1 // pred_check
      _
    $region3: #{tpu_custom_call.1} parent=1 // pred_check_branch
      %12 = sbr.rel (0) target = $region5
    $region4: #{tpu_custom_call.1} parent=1 // pred_region
      _
    $region5: #{tpu_custom_call.1} parent=1 // pred_fallthru
      _
    // Predicated region
    $region6: #{tpu_custom_call.1} parent=1 // pred_check
      _
    $region7: #{tpu_custom_call.1} parent=1 // pred_check_branch
      %14 = sbr.rel (0) target = $region9
    $region8: #{tpu_custom_call.1} parent=1 // pred_region
      _
    $region9: #{tpu_custom_call.1} parent=1 // pred_fallthru
      _
    // Predicated region
    $region10: #{tpu_custom_call.1} parent=1 // pred_check
      _
    $region11: #{tpu_custom_call.1} parent=1 // pred_check_branch
      %16 = sbr.rel (0) target = $region13
    $region12: #{tpu_custom_call.1} parent=1 // pred_region
      _
    $region13: #{tpu_custom_call.1} parent=1 // pred_fallthru
      _
    // Predicated region
    $region14: #{tpu_custom_call.1} parent=1 // pred_check
      _
    $region15: #{tpu_custom_call.1} parent=1 // pred_check_branch
      %18 = sbr.rel (0) target = $region17
    $region16: #{tpu_custom_call.1} parent=1 // pred_region
      _
    $region17: #{tpu_custom_call.1} parent=1 // pred_fallthru
      _
    // Predicated region
    $region18: #{tpu_custom_call.1} parent=1 // pred_check
      _
    $region19: #{tpu_custom_call.1} parent=1 // pred_check_branch
      %20 = sbr.rel (0) target = $region21
    $region20: #{tpu_custom_call.1} parent=1 // pred_region
      _
    $region21: #{tpu_custom_call.1} parent=1 // pred_fallthru
      _
    %p22 = scmp.eq.s32.totalorder 0, 0
    // Predicated region
    $region22: #{tpu_custom_call.1} parent=1 // pred_check
      %p23 = pneg %p22
    $region23: #{tpu_custom_call.1} parent=1 // pred_check_branch
      %25 = sbr.rel (%p23) target = $region25
    $region24: #{tpu_custom_call.1} parent=1 // pred_region
      %vm26 = vcmask 130048
      %27 = vst.msk [vmem:[#allocation2] sm:$0xff] %vm26, 0.0
    $region25: #{tpu_custom_call.1} parent=1 // pred_fallthru
      _
    %v28 = vld [vmem:[%s0] sm:$0xff]
    %v29 = vpack.c.bf16 %v28, %v28
    %v30 = vld [vmem:[%s1] sm:$0xf]
    %v31 = vld [vmem:[%s1 + $0x4] sm:$0xf]
    %v32 = vld [vmem:[%s1 + $0x8] sm:$0xf]
    %v33 = vld [vmem:[%s1 + $0xc] sm:$0xf]
    %v34 = vld [vmem:[%s2] sm:$0x1]
    %v36 = vlaneseq
    %v37 = vshrl.u32 %v36, 7
    %v38 = vsub.s32 0, %v37
    %v39 = vrot.slane %v34, %v38
    %v45 = vunpack.c.l.b16 %v30
    %v46 = vunpack.c.l.b16 %v31
    %v47 = vunpack.c.l.b16 %v32
    %v48 = vunpack.c.l.b16 %v33
    %v49 = vpack.c.b16 %v46, %v45
    %v50 = vpack.c.b16 %v48, %v47
    %vm53 = vcmask 261120
    %v55 = vsel %vm53, %v29, 0
    %57 = vmatprep.subr.bf16.mxu0 0
    %58 = vmatpush1.bf16.msra.mxu0 %v49
    %59 = vmatprep.subr.bf16.mxu0 0
    %60 = vmatpush1.bf16.msra.mxu0 %v50
    %61 = vmatprep.subr.bf16.mxu0 0
    %62 = vmatpush1.bf16.msra.mxu0 0
    %63 = vmatprep.subr.bf16.mxu0 0
    %64 = vmatpush1.bf16.msra.mxu0 0
    %65 = vmatprep.subr.bf16.mxu0 0
    %66 = vmatpush1.bf16.msra.mxu0 0
    %67 = vmatprep.subr.bf16.mxu0 0
    %68 = vmatpush1.bf16.msra.mxu0 0
    %69 = vmatprep.subr.bf16.mxu0 0
    %70 = vmatpush1.bf16.msra.mxu0 0
    %71 = vmatprep.subr.bf16.mxu0 0
    %72 = vmatpush1.bf16.msra.mxu0 0
    %73 = vmatprep.subr.bf16.mxu0 0
    %74 = vmatpush1.bf16.msra.mxu0 0
    %75 = vmatprep.subr.bf16.mxu0 0
    %76 = vmatpush1.bf16.msra.mxu0 0
    %77 = vmatprep.subr.bf16.mxu0 0
    %78 = vmatpush1.bf16.msra.mxu0 0
    %79 = vmatprep.subr.bf16.mxu0 0
    %80 = vmatpush1.bf16.msra.mxu0 0
    %81 = vmatprep.subr.bf16.mxu0 0
    %82 = vmatpush1.bf16.msra.mxu0 0
    %83 = vmatprep.subr.bf16.mxu0 0
    %84 = vmatpush1.bf16.msra.mxu0 0
    %85 = vmatprep.subr.bf16.mxu0 0
    %86 = vmatpush1.bf16.msra.mxu0 0
    %87 = vmatprep.subr.bf16.mxu0 0
    %88 = vmatpush1.bf16.msra.mxu0 0
    %89 = vmatprep.mubr.bf16.mxu0 0
    %90 = vmatmul.mubr.bf16.gmra.mrb[0].mxu0 %v55
    %v91 = vpop.f32.mrb[0].mxu0
    %v92 = vadd.f32 %v39, %v91
    %v93 = vpop.f32.mrb[0].mxu0
    %v94 = vpop.f32.mrb[0].mxu0
    %v95 = vpop.f32.mrb[0].mxu0
    %96 = vdwg.mxu0
    %v97 = vtanh.pop %v92
    %v98 = vld [vmem:[#allocation2] sm:$0xff]
    %v99 = vpack.c.bf16 %v97, %v97
    %v100 = vld [vmem:[%s3] sm:$0xf]
    %v101 = vld [vmem:[%s3 + $0x4] sm:$0xf]
    %v102 = vld [vmem:[%s3 + $0x8] sm:$0xf]
    %v103 = vld [vmem:[%s3 + $0xc] sm:$0xf]
    %v104 = vld [vmem:[%s3 + $0x10] sm:$0xf]
    %v105 = vld [vmem:[%s3 + $0x14] sm:$0xf]
    %v106 = vld [vmem:[%s3 + $0x18] sm:$0xf]
    %v107 = vld [vmem:[%s3 + $0x1c] sm:$0xf]
    %v116 = vunpack.c.l.b16 %v100
    %v117 = vunpack.c.l.b16 %v101
    %v118 = vunpack.c.l.b16 %v102
    %v119 = vunpack.c.l.b16 %v103
    %v120 = vunpack.c.l.b16 %v104
    %v121 = vunpack.c.l.b16 %v105
    %v122 = vunpack.c.l.b16 %v106
    %v123 = vunpack.c.l.b16 %v107
    %v124 = vpack.c.b16 %v117, %v116
    %v125 = vpack.c.b16 %v119, %v118
    %v126 = vpack.c.b16 %v121, %v120
    %v127 = vpack.c.b16 %v123, %v122
    %vm132 = vcmask 523264
    %v134 = vsel %vm132, %v99, 0
    %136 = vmatprep.subr.bf16.mxu0 0
    %137 = vmatpush1.bf16.msra.mxu0 %v124
    %138 = vmatprep.subr.bf16.mxu0 0
    %139 = vmatpush1.bf16.msra.mxu0 %v125
    %140 = vmatprep.subr.bf16.mxu0 0
    %141 = vmatpush1.bf16.msra.mxu0 %v126
    %142 = vmatprep.subr.bf16.mxu0 0
    %143 = vmatpush1.bf16.msra.mxu0 %v127
    %144 = vmatprep.subr.bf16.mxu0 0
    %145 = vmatpush1.bf16.msra.mxu0 0
    %146 = vmatprep.subr.bf16.mxu0 0
    %147 = vmatpush1.bf16.msra.mxu0 0
    %148 = vmatprep.subr.bf16.mxu0 0
    %149 = vmatpush1.bf16.msra.mxu0 0
    %150 = vmatprep.subr.bf16.mxu0 0
    %151 = vmatpush1.bf16.msra.mxu0 0
    %152 = vmatprep.subr.bf16.mxu0 0
    %153 = vmatpush1.bf16.msra.mxu0 0
    %154 = vmatprep.subr.bf16.mxu0 0
    %155 = vmatpush1.bf16.msra.mxu0 0
    %156 = vmatprep.subr.bf16.mxu0 0
    %157 = vmatpush1.bf16.msra.mxu0 0
    %158 = vmatprep.subr.bf16.mxu0 0
    %159 = vmatpush1.bf16.msra.mxu0 0
    %160 = vmatprep.subr.bf16.mxu0 0
    %161 = vmatpush1.bf16.msra.mxu0 0
    %162 = vmatprep.subr.bf16.mxu0 0
    %163 = vmatpush1.bf16.msra.mxu0 0
    %164 = vmatprep.subr.bf16.mxu0 0
    %165 = vmatpush1.bf16.msra.mxu0 0
    %166 = vmatprep.subr.bf16.mxu0 0
    %167 = vmatpush1.bf16.msra.mxu0 0
    %168 = vmatprep.mubr.bf16.mxu0 0
    %169 = vmatmul.mubr.bf16.gmra.mrb[0].mxu0 %v134
    %v170 = vpop.f32.mrb[0].mxu0
    %v171 = vadd.f32 0.0, %v170
    %v172 = vpop.f32.mrb[0].mxu0
    %v173 = vpop.f32.mrb[0].mxu0
    %v174 = vpop.f32.mrb[0].mxu0
    %175 = vdwg.mxu0
    %v176 = vadd.f32 %v98, %v171
    %vm177 = vcmask 130048
    %178 = vst.msk [vmem:[#allocation2] sm:$0xff] %vm177, %v176
    // Predicated region
    $region26: #{tpu_custom_call.1} parent=1 // pred_check
      %p179 = pneg %p22
    $region27: #{tpu_custom_call.1} parent=1 // pred_check_branch
      %181 = sbr.rel (%p179) target = $region29
    $region28: #{tpu_custom_call.1} parent=1 // pred_region
      %v182 = vld [vmem:[#allocation2] sm:$0xff]
      %v183 = vld [vmem:[%s4] sm:$0x1]
      %v185 = vlaneseq
      %v186 = vshrl.u32 %v185, 7
      %v187 = vsub.s32 0, %v186
      %v188 = vrot.slane %v183, %v187
      %v190 = vadd.f32 %v182, %v188
      %v191 = vxor.u32 %v190, 2147483648
      %v192 = vmul.f32 %v191, 1.442695
      %v193 = vpow.pop %v192
      %v194 = vadd.f32 %v193, 1.0
      %v195 = vrcp.pop %v194
      %v196 = vmul.f32 1.0, %v195
      %197 = vst.msk [vmem:[#allocation3] sm:$0xff] %vm177, %v196
    $region29: #{tpu_custom_call.1} parent=1 // pred_fallthru
      _
    // Predicated region
    $region30: #{tpu_custom_call.1} parent=1 // pred_check
      _
    $region31: #{tpu_custom_call.1} parent=1 // pred_check_branch
      %199 = sbr.rel (0) target = $region33
    $region32: #{tpu_custom_call.1} parent=1 // pred_region
      %s201 = ssub.s32 128, 128
      %202 = vsyncadd [#allocation4], %s201
      %s204 = sshll.u32 [#allocation3], 4
      %s205 = int_to_ptr.vmem [resolvable:$true] %s204
      %207 = dma.vmem_to_hbm [thread:$0]  %s205, 128, %s5, [#allocation4]
    $region33: #{tpu_custom_call.1} parent=1 // pred_fallthru
      _
    // Predicated region
    $region34: #{tpu_custom_call.1} parent=1 // pred_check
      _
    $region35: #{tpu_custom_call.1} parent=1 // pred_check_branch
      %209 = sbr.rel (0) target = $region37
    $region36: #{tpu_custom_call.1} parent=1 // pred_region
      %210 = dma.done [#allocation4], 128
    $region37: #{tpu_custom_call.1} parent=1 // pred_fallthru
      _
    %211 = vsyncpa [#allocation4], 1

</llo_original>
